<compile_context>
chip_gen: v7x
topology: tpu7x:2x2x1
jax: 0.10.0
libtpu: 0.0.40
codegen_flags: <defaults>
</compile_context>

<pallas_src>
import jax
import jax.numpy as jnp
from jax import lax
from jax.experimental import pallas as pl
from jax.experimental.pallas import tpu as pltpu


def convlstm_kernel(p_ref, c_ref, w_ref, b_ref, h_out_ref, c_out_ref):
    # Block shapes (TS = spatial tile, KKC = K*K*(Cin+NH), NH4 = 4*NH):
    #   p_ref    : (1, KKC, TS)   bf16   im2col patches
    #   c_ref    : (1, NH,  TS)   f32    previous cell state
    #   w_ref    : (NH4, KKC)     bf16   fused conv weight
    #   b_ref    : (NH4, 1)       f32    fused bias (bx + bh)
    #   h_out_ref: (1, NH, TS)    f32
    #   c_out_ref: (1, NH, TS)    f32
    NH = c_ref.shape[1]

    # One big MXU matmul: (NH4, KKC) @ (KKC, TS) -> (NH4, TS), f32 accumulate.
    acc = jnp.dot(w_ref[...], p_ref[0], preferred_element_type=jnp.float32)
    acc = acc + b_ref[...]  # (NH4, 1) broadcasts over lanes

    # Gate split along sublanes (multiples of NH) -- no lane shuffles.
    i_t = jax.nn.sigmoid(acc[0 * NH:1 * NH])
    f_t = jax.nn.sigmoid(acc[1 * NH:2 * NH])
    g_t = jnp.tanh(acc[2 * NH:3 * NH])
    o_t = jax.nn.sigmoid(acc[3 * NH:4 * NH])

    c_prev = c_ref[0]
    c_new = f_t * c_prev + i_t * g_t
    h_new = o_t * jnp.tanh(c_new)

    c_out_ref[0] = c_new
    h_out_ref[0] = h_new


def _pick_spatial_tile(hw, cap=2048):
    """Largest multiple-of-128 tile <= cap that divides H*W (else full extent)."""
    if hw < 128 or hw % 128 != 0:
        return hw
    t = min(hw, cap)
    t -= t % 128
    while hw % t != 0:
        t -= 128
    return t


def convlstm_cell_forward(x_nchw, c_nchw, h_nchw, wx_oihw, bx, wh_oihw, bh,
                          filter_size):
    """Pallas ConvLSTMCell forward. Returns (h_new, (c_new, h_new)) in NCHW."""
    K = filter_size
    if K % 2 != 1:
        # padding = K//2 only reproduces 'same' output size for odd K
        # (matches the PyTorch module's intended use).
        raise ValueError("filter_size must be odd for 'same' padding semantics")
    pad = K // 2

    B, Cin, H, W = x_nchw.shape
    NH = h_nchw.shape[1]
    NH4 = 4 * NH
    C = Cin + NH
    HW = H * W
    KKC = K * K * C

    # ---- wrapper-side prep (plain JAX, all layout-trivial in NCHW) ----
    # Fuse x/h conv inputs along channels; pad spatially for the halo.
    xh = jnp.concatenate([x_nchw, h_nchw], axis=1).astype(jnp.float32)
    xh_pad = jnp.pad(xh, ((0, 0), (0, 0), (pad, pad), (pad, pad)))

    # im2col: patches[b, t*C + c, i*W + j] = xh_pad[b, c, i+kh, j+kw], t=kh*K+kw
    taps = [xh_pad[:, :, kh:kh + H, kw:kw + W]
            for kh in range(K) for kw in range(K)]
    patches = jnp.stack(taps, axis=1).reshape(B, KKC, HW).astype(jnp.bfloat16)

    # Fused weight: concat (OIHW) along input channels, then reorder so the
    # flat contraction index matches the patch rows: (NH4, K, K, C) -> (NH4, KKC).
    w = jnp.concatenate([wx_oihw, wh_oihw], axis=1).astype(jnp.float32)
    w_flat = jnp.transpose(w, (0, 2, 3, 1)).reshape(NH4, KKC).astype(jnp.bfloat16)

    bias = (bx + bh).reshape(NH4, 1).astype(jnp.float32)

    # Previous cell state: NCHW -> (B, NH, H*W) is a trivial reshape.
    c_prev = c_nchw.reshape(B, NH, HW).astype(jnp.float32)

    TS = _pick_spatial_tile(HW)
    grid = (B, HW // TS)

    h_new, c_new = pl.pallas_call(
        convlstm_kernel,
        out_shape=(jax.ShapeDtypeStruct((B, NH, HW), jnp.float32),
                   jax.ShapeDtypeStruct((B, NH, HW), jnp.float32)),
        grid_spec=pltpu.PrefetchScalarGridSpec(
            num_scalar_prefetch=0,
            grid=grid,
            in_specs=[
                pl.BlockSpec((1, KKC, TS), lambda b, s: (b, 0, s)),
                pl.BlockSpec((1, NH, TS), lambda b, s: (b, 0, s)),
                pl.BlockSpec((NH4, KKC), lambda b, s: (0, 0)),
                pl.BlockSpec((NH4, 1), lambda b, s: (0, 0)),
            ],
            out_specs=[
                pl.BlockSpec((1, NH, TS), lambda b, s: (b, 0, s)),
                pl.BlockSpec((1, NH, TS), lambda b, s: (b, 0, s)),
            ],
        ),
        compiler_params=pltpu.CompilerParams(
            dimension_semantics=("parallel", "parallel"),
            vmem_limit_bytes=48 * 1024 * 1024),
    )(patches, c_prev, w_flat, bias)

    h_new = h_new.reshape(B, NH, H, W)
    c_new = c_new.reshape(B, NH, H, W)
    return h_new, (c_new, h_new)


def _reference_forward(x_nchw, c_nchw, h_nchw, wx_oihw, bx, wh_oihw, bh,
                       filter_size):
    """Pure-JAX f32 reference replicating the PyTorch forward exactly (NCHW)."""
    pad = filter_size // 2

    def conv(inp, w, b):
        out = lax.conv_general_dilated(
            inp, w, window_strides=(1, 1),
            padding=[(pad, pad), (pad, pad)],
            dimension_numbers=("NCHW", "OIHW", "NCHW"))
        return out + b.reshape(1, -1, 1, 1)

    x_concat = conv(x_nchw, wx_oihw, bx)
    h_concat = conv(h_nchw, wh_oihw, bh)
    i_x, f_x, g_x, o_x = jnp.split(x_concat, 4, axis=1)
    i_h, f_h, g_h, o_h = jnp.split(h_concat, 4, axis=1)
    i_t = jax.nn.sigmoid(i_x + i_h)
    f_t = jax.nn.sigmoid(f_x + f_h)
    g_t = jnp.tanh(g_x + g_h)
    o_t = jax.nn.sigmoid(o_x + o_h)
    c_new = f_t * c_nchw + i_t * g_t
    h_new = o_t * jnp.tanh(c_new)
    return h_new, (c_new, h_new)


if __name__ == "__main__":
    # Small, deterministic problem consistent with the module.
    B, Cin, H, W = 2, 4, 16, 16
    NH = 8           # num_hidden
    K = 3            # filter_size

    key = jax.random.PRNGKey(0)
    k = jax.random.split(key, 7)
    x = jax.random.normal(k[0], (B, Cin, H, W), jnp.float32)      # NCHW input
    c0 = jax.random.normal(k[1], (B, NH, H, W), jnp.float32)
    h0 = jax.random.normal(k[2], (B, NH, H, W), jnp.float32)

    # conv_x: Conv2d(Cin -> 4*NH, K), conv_h: Conv2d(NH -> 4*NH, K), OIHW.
    wx = 0.1 * jax.random.normal(k[3], (4 * NH, Cin, K, K), jnp.float32)
    bx = 0.1 * jax.random.normal(k[4], (4 * NH,), jnp.float32)
    wh = 0.1 * jax.random.normal(k[5], (4 * NH, NH, K, K), jnp.float32)
    bh = 0.1 * jax.random.normal(k[6], (4 * NH,), jnp.float32)
    # conv_o is declared in the PyTorch __init__ but never used in forward().

    h_new, (c_new, h_new2) = convlstm_cell_forward(x, c0, h0, wx, bx, wh, bh, K)
    jax.block_until_ready((h_new, c_new))

    h_ref, (c_ref, _) = _reference_forward(x, c0, h0, wx, bx, wh, bh, K)
    # Tolerance loosened vs the f32 version: matmul operands are bf16
    # (accumulation stays f32), per the performance review.
    assert jnp.allclose(h_new, h_ref, atol=5e-2, rtol=5e-2), "h mismatch"
    assert jnp.allclose(c_new, c_ref, atol=5e-2, rtol=5e-2), "c mismatch"
    assert h_new.shape == (B, NH, H, W) and c_new.shape == (B, NH, H, W)

    print("KERNEL_OK")
</pallas_src>

<mosaic_0001>
module attributes {stable_mosaic.version = 11 : i64} {
  func.func @convlstm_kernel(%arg0: i32, %arg1: i32, %arg2: memref<1x108x256xbf16, #tpu.memory_space<vmem>>, %arg3: memref<1x8x256xf32, #tpu.memory_space<vmem>>, %arg4: memref<32x108xbf16, #tpu.memory_space<vmem>>, %arg5: memref<32x1xf32, #tpu.memory_space<vmem>>, %arg6: memref<1x8x256xf32, #tpu.memory_space<vmem>>, %arg7: memref<1x8x256xf32, #tpu.memory_space<vmem>>) attributes {dimension_semantics = [#tpu.dimension_semantics<parallel>, #tpu.dimension_semantics<parallel>], iteration_bounds = array<i64: 2, 1>, scalar_prefetch = 0 : i64, scratch_operands = 0 : i64, tpu.core_type = #tpu.core_type<tc>, window_params = [{transform_indices = @transform_0, window_bounds = array<i64: 1, 108, 256>}, {transform_indices = @transform_1, window_bounds = array<i64: 1, 8, 256>}, {pipeline_mode = #tpu.pipeline_mode<synchronous>, transform_indices = @transform_2, window_bounds = array<i64: 32, 108>}, {pipeline_mode = #tpu.pipeline_mode<synchronous>, transform_indices = @transform_3, window_bounds = array<i64: 32, 1>}, {transform_indices = @transform_4, window_bounds = array<i64: 1, 8, 256>}, {transform_indices = @transform_5, window_bounds = array<i64: 1, 8, 256>}]} {
    %c0 = arith.constant 0 : index
    %c0_0 = arith.constant 0 : index
    %0 = vector.load %arg4[%c0, %c0_0] : memref<32x108xbf16, #tpu.memory_space<vmem>>, vector<32x108xbf16>
    %c0_1 = arith.constant 0 : index
    %c0_2 = arith.constant 0 : index
    %c0_3 = arith.constant 0 : index
    %1 = vector.load %arg2[%c0_1, %c0_2, %c0_3] : memref<1x108x256xbf16, #tpu.memory_space<vmem>>, vector<1x108x256xbf16>
    %2 = vector.shape_cast %1 : vector<1x108x256xbf16> to vector<108x256xbf16>
    %cst = arith.constant dense<0.000000e+00> : vector<32x256xf32>
    %3 = tpu.matmul %0, %2, %cst {dimension_numbers = #tpu.dot_dimension_numbers<[1], [0], [0], [1], [0, 0, 1, 1], [], []>} : vector<32x108xbf16>, vector<108x256xbf16>, vector<32x256xf32> -> vector<32x256xf32>
    %c0_4 = arith.constant 0 : index
    %c0_5 = arith.constant 0 : index
    %4 = vector.load %arg5[%c0_4, %c0_5] : memref<32x1xf32, #tpu.memory_space<vmem>>, vector<32x1xf32>
    %5 = vector.broadcast %4 : vector<32x1xf32> to vector<32x256xf32>
    %6 = arith.addf %3, %5 : vector<32x256xf32>
    %7 = vector.extract_strided_slice %6 {offsets = [0, 0], sizes = [8, 256], strides = [1, 1]} : vector<32x256xf32> to vector<8x256xf32>
    %8 = arith.negf %7 : vector<8x256xf32>
    %9 = math.exp %8 : vector<8x256xf32>
    %cst_6 = arith.constant 1.000000e+00 : f32
    %10 = vector.broadcast %cst_6 : f32 to vector<8x256xf32>
    %11 = arith.addf %10, %9 : vector<8x256xf32>
    %12 = arith.divf %10, %11 : vector<8x256xf32>
    %13 = vector.extract_strided_slice %6 {offsets = [8, 0], sizes = [8, 256], strides = [1, 1]} : vector<32x256xf32> to vector<8x256xf32>
    %14 = arith.negf %13 : vector<8x256xf32>
    %15 = math.exp %14 : vector<8x256xf32>
    %cst_7 = arith.constant 1.000000e+00 : f32
    %16 = vector.broadcast %cst_7 : f32 to vector<8x256xf32>
    %17 = arith.addf %16, %15 : vector<8x256xf32>
    %18 = arith.divf %16, %17 : vector<8x256xf32>
    %19 = vector.extract_strided_slice %6 {offsets = [16, 0], sizes = [8, 256], strides = [1, 1]} : vector<32x256xf32> to vector<8x256xf32>
    %20 = math.tanh %19 : vector<8x256xf32>
    %21 = vector.extract_strided_slice %6 {offsets = [24, 0], sizes = [8, 256], strides = [1, 1]} : vector<32x256xf32> to vector<8x256xf32>
    %22 = arith.negf %21 : vector<8x256xf32>
    %23 = math.exp %22 : vector<8x256xf32>
    %cst_8 = arith.constant 1.000000e+00 : f32
    %24 = vector.broadcast %cst_8 : f32 to vector<8x256xf32>
    %25 = arith.addf %24, %23 : vector<8x256xf32>
    %26 = arith.divf %24, %25 : vector<8x256xf32>
    %c0_9 = arith.constant 0 : index
    %c0_10 = arith.constant 0 : index
    %c0_11 = arith.constant 0 : index
    %27 = vector.load %arg3[%c0_9, %c0_10, %c0_11] : memref<1x8x256xf32, #tpu.memory_space<vmem>>, vector<1x8x256xf32>
    %28 = vector.shape_cast %27 : vector<1x8x256xf32> to vector<8x256xf32>
    %29 = arith.mulf %18, %28 : vector<8x256xf32>
    %30 = arith.mulf %12, %20 : vector<8x256xf32>
    %31 = arith.addf %29, %30 : vector<8x256xf32>
    %32 = math.tanh %31 : vector<8x256xf32>
    %33 = arith.mulf %26, %32 : vector<8x256xf32>
    %c0_12 = arith.constant 0 : index
    %c0_13 = arith.constant 0 : index
    %c0_14 = arith.constant 0 : index
    %34 = vector.load %arg7[%c0_12, %c0_13, %c0_14] : memref<1x8x256xf32, #tpu.memory_space<vmem>>, vector<1x8x256xf32>
    %35 = vector.shape_cast %34 : vector<1x8x256xf32> to vector<8x256xf32>
    %36 = vector.shape_cast %31 : vector<8x256xf32> to vector<1x8x256xf32>
    tpu.vector_store %arg7[%c0_12, %c0_13, %c0_14], %36 {strides = array<i32>} : memref<1x8x256xf32, #tpu.memory_space<vmem>>, vector<1x8x256xf32>,
    %c0_15 = arith.constant 0 : index
    %c0_16 = arith.constant 0 : index
    %c0_17 = arith.constant 0 : index
    %37 = vector.load %arg6[%c0_15, %c0_16, %c0_17] : memref<1x8x256xf32, #tpu.memory_space<vmem>>, vector<1x8x256xf32>
    %38 = vector.shape_cast %37 : vector<1x8x256xf32> to vector<8x256xf32>
    %39 = vector.shape_cast %33 : vector<8x256xf32> to vector<1x8x256xf32>
    tpu.vector_store %arg6[%c0_15, %c0_16, %c0_17], %39 {strides = array<i32>} : memref<1x8x256xf32, #tpu.memory_space<vmem>>, vector<1x8x256xf32>,
    return
  }
  func.func @transform_0(%arg0: i32, %arg1: i32) -> (i32, i32, i32) {
    %c0_i32 = arith.constant 0 : i32
    %c0_i32_0 = arith.constant 0 : i32
    return %arg0, %c0_i32, %arg1 : i32, i32, i32
  }
  func.func @transform_1(%arg0: i32, %arg1: i32) -> (i32, i32, i32) {
    %c0_i32 = arith.constant 0 : i32
    %c0_i32_0 = arith.constant 0 : i32
    return %arg0, %c0_i32, %arg1 : i32, i32, i32
  }
  func.func @transform_2(%arg0: i32, %arg1: i32) -> (i32, i32) {
    %c0_i32 = arith.constant 0 : i32
    %c0_i32_0 = arith.constant 0 : i32
    %c0_i32_1 = arith.constant 0 : i32
    return %c0_i32, %c0_i32_0 : i32, i32
  }
  func.func @transform_3(%arg0: i32, %arg1: i32) -> (i32, i32) {
    %c0_i32 = arith.constant 0 : i32
    %c0_i32_0 = arith.constant 0 : i32
    %c0_i32_1 = arith.constant 0 : i32
    return %c0_i32, %c0_i32_0 : i32, i32
  }
  func.func @transform_4(%arg0: i32, %arg1: i32) -> (i32, i32, i32) {
    %c0_i32 = arith.constant 0 : i32
    %c0_i32_0 = arith.constant 0 : i32
    return %arg0, %c0_i32, %arg1 : i32, i32, i32
  }
  func.func @transform_5(%arg0: i32, %arg1: i32) -> (i32, i32, i32) {
    %c0_i32 = arith.constant 0 : i32
    %c0_i32_0 = arith.constant 0 : i32
    return %arg0, %c0_i32, %arg1 : i32, i32, i32
  }
}

</mosaic_0001>

<llo_original>
// kernel: tpu_custom_call.1
$region0: #{tpu_custom_call.1}
  #allocation0 [shape = 'u32[]', space=smem, size = 0x4, offset = 0x4, fixed_abs, tag = 'smem constant byte address 0x4 - core index']
  #allocation1 [shape = 'u32[144,128]{1,0:T(1,128)}', space=vmem, size = 0x12000, scoped, tag = 'internal scratch']
  %s0 = inlined_call_operand.vmem [shape: bf16[2,108,256], index: 0, kind: input, shape index: {}]
  %s1 = inlined_call_operand.vmem [shape: f32[2,8,256], index: 1, kind: input, shape index: {}]
  %s2 = inlined_call_operand.vmem [shape: bf16[32,108], index: 2, kind: input, shape index: {}]
  %s3 = inlined_call_operand.vmem [shape: f32[32,1], index: 3, kind: input, shape index: {}]
  %s4 = inlined_call_operand.hbm [shape: f32[2,8,256], index: 4, kind: output, shape index: {0}]
  %s5 = inlined_call_operand.hbm [shape: f32[2,8,256], index: 5, kind: output, shape index: {1}]
  %6 = xla_tuple %s4, %s5
  %s7 = sld [smem:[#allocation0]]
  $region57: #{tpu_custom_call.1} parent=0
    _
  %s9 = ssub.s32 1, %s7
  %s10 = scalar_select 0, %s9, %s7
  $region1: #{tpu_custom_call.1} parent=0
    #allocation2 [shape = 'u8[16384]{0}', space=vmem, size = 0x4000, scoped, tag = 'output window, operand 0']
    #allocation3 [shape = 's32[2]{0}', space=sflag, size = 0x8, scoped, tag = 'scoped memory for tpu_custom_call.1']
    #allocation4 [shape = 'u8[16384]{0}', space=vmem, size = 0x4000, scoped, tag = 'output window, operand 1']
    #allocation5 [shape = 's32[2]{0}', space=sflag, size = 0x8, scoped, tag = 'scoped memory for tpu_custom_call.1']
    %11 = vsyncpa [#allocation3], 0
    %s12 = scalar_lea.sflag [#allocation3], 1
    %13 = vsyncpa %s12, 0
    %14 = vsyncpa [#allocation5], 0
    %s15 = scalar_lea.sflag [#allocation5], 1
    %16 = vsyncpa %s15, 0
    loop: start=0, step=1, limit=4
    $region2: #{tpu_custom_call.1} parent=1 // loop_pre_header
      _
    $region3: #{tpu_custom_call.1} parent=1 // loop_header
      %s18 = sphi 0, %s22
      %p19 = scmp.ge.s32.totalorder %s18, 4
      %s25 = sphi 0, %s37
      %s26 = sphi 0, %s33
      %s27 = sphi 0, %s25
      %s28 = sphi 0, %s26
      %s29 = sphi 0, %s27
      %s30 = sphi 0, %s28
      %s42 = sphi 0, %s44
      %s45 = sphi 0, %s42
      %s46 = sphi 0, %s45
      %s62 = sphi 0, %s46
      %s70 = sphi 0, %s72
      %s73 = sphi 0, %s70
      %s74 = sphi 0, %s73
      %s90 = sphi 0, %s74
      %s94 = sphi 0, %s94
      %s96 = sphi 0, %s94
      %s97 = sphi 0, %s96
      %s111 = sphi 0, %s97
      %s115 = sphi 0, %s115
      %s117 = sphi 0, %s115
      %s118 = sphi 0, %s117
      %s132 = sphi 0, %s118
      %s140 = sphi 0, %s142
      %s143 = sphi 0, %s140
      %s144 = sphi 0, %s143
      %s160 = sphi 0, %s144
      %s168 = sphi 0, %s170
      %s171 = sphi 0, %s168
      %s172 = sphi 0, %s171
      %s188 = sphi 0, %s172
    $region4: #{tpu_custom_call.1} parent=1 // loop_header_branch
      %21 = sbr.rel (%p19) target = $region8
    $region5: #{tpu_custom_call.1} parent=1 // loop_body
      %s23 = ssub.s32 %s18, 1
      %s24 = ssub.s32 %s18, 2
      %s31 = sadd.s32 1, %s26
      %p32 = scmp.ge.s32.totalorder %s31, 1
      %s33 = scalar_select %p32, 0, %s31
      %s34 = sadd.s32 1, %s25
      %s35 = scalar_select %p32, %s34, %s25
      %p36 = scmp.ge.s32.totalorder %s35, 2
      %s37 = scalar_select %p36, 0, %s35
      %s38 = ssub.s32 %s25, %s37
      %s39 = ssub.s32 %s26, %s33
      %s40 = sor.u32 %s38, %s39
      %p41 = scmp.eq.s32.totalorder %s40, 0
      %s43 = sadd.s32 %s42, 1
      %s44 = scalar_select %p41, %s42, %s43
      %p47 = pneg %p41
      %p48 = scmp.eq.s32.totalorder %s18, 1
      %p49 = por %p47, %p48
      %p50 = scmp.ne.s32.totalorder %s42, %s45
      %p51 = scmp.eq.s32.totalorder %s18, 0
      %p52 = por %p50, %p51
      %p53 = scmp.ne.s32.totalorder %s42, %s45
      %p54 = scmp.eq.s32.totalorder %s23, 1
      %p55 = por %p53, %p54
      %p56 = scmp.ne.s32.totalorder %s45, %s46
      %p57 = scmp.eq.s32.totalorder %s23, 0
      %p58 = por %p56, %p57
      %p59 = scmp.ne.s32.totalorder %s45, %s46
      %p60 = scmp.eq.s32.totalorder %s24, 1
      %p61 = por %p59, %p60
      %p63 = scmp.ne.s32.totalorder %s46, %s62
      %p64 = scmp.eq.s32.totalorder %s24, 0
      %p65 = por %p63, %p64
      %s66 = ssub.s32 %s25, %s37
      %s67 = ssub.s32 %s26, %s33
      %s68 = sor.u32 %s66, %s67
      %p69 = scmp.eq.s32.totalorder %s68, 0
      %s71 = sadd.s32 %s70, 1
      %s72 = scalar_select %p69, %s70, %s71
      %p75 = pneg %p69
      %p76 = scmp.eq.s32.totalorder %s18, 1
      %p77 = por %p75, %p76
      %p78 = scmp.ne.s32.totalorder %s70, %s73
      %p79 = scmp.eq.s32.totalorder %s18, 0
      %p80 = por %p78, %p79
      %p81 = scmp.ne.s32.totalorder %s70, %s73
      %p82 = scmp.eq.s32.totalorder %s23, 1
      %p83 = por %p81, %p82
      %p84 = scmp.ne.s32.totalorder %s73, %s74
      %p85 = scmp.eq.s32.totalorder %s23, 0
      %p86 = por %p84, %p85
      %p87 = scmp.ne.s32.totalorder %s73, %s74
      %p88 = scmp.eq.s32.totalorder %s24, 1
      %p89 = por %p87, %p88
      %p91 = scmp.ne.s32.totalorder %s74, %s90
      %p92 = scmp.eq.s32.totalorder %s24, 0
      %p93 = por %p91, %p92
      %s95 = sadd.s32 %s94, 1
      %p98 = scmp.eq.s32.totalorder %s18, 1
      %p99 = scmp.ne.s32.totalorder %s94, %s96
      %p100 = scmp.eq.s32.totalorder %s18, 0
      %p101 = por %p99, %p100
      %p102 = scmp.ne.s32.totalorder %s94, %s96
      %p103 = scmp.eq.s32.totalorder %s23, 1
      %p104 = por %p102, %p103
      %p105 = scmp.ne.s32.totalorder %s96, %s97
      %p106 = scmp.eq.s32.totalorder %s23, 0
      %p107 = por %p105, %p106
      %p108 = scmp.ne.s32.totalorder %s96, %s97
      %p109 = scmp.eq.s32.totalorder %s24, 1
      %p110 = por %p108, %p109
      %p112 = scmp.ne.s32.totalorder %s97, %s111
      %p113 = scmp.eq.s32.totalorder %s24, 0
      %p114 = por %p112, %p113
      %s116 = sadd.s32 %s115, 1
      %p119 = scmp.eq.s32.totalorder %s18, 1
      %p120 = scmp.ne.s32.totalorder %s115, %s117
      %p121 = scmp.eq.s32.totalorder %s18, 0
      %p122 = por %p120, %p121
      %p123 = scmp.ne.s32.totalorder %s115, %s117
      %p124 = scmp.eq.s32.totalorder %s23, 1
      %p125 = por %p123, %p124
      %p126 = scmp.ne.s32.totalorder %s117, %s118
      %p127 = scmp.eq.s32.totalorder %s23, 0
      %p128 = por %p126, %p127
      %p129 = scmp.ne.s32.totalorder %s117, %s118
      %p130 = scmp.eq.s32.totalorder %s24, 1
      %p131 = por %p129, %p130
      %p133 = scmp.ne.s32.totalorder %s118, %s132
      %p134 = scmp.eq.s32.totalorder %s24, 0
      %p135 = por %p133, %p134
      %s136 = ssub.s32 %s25, %s37
      %s137 = ssub.s32 %s26, %s33
      %s138 = sor.u32 %s136, %s137
      %p139 = scmp.eq.s32.totalorder %s138, 0
      %s141 = sadd.s32 %s140, 1
      %s142 = scalar_select %p139, %s140, %s141
      %p145 = pneg %p139
      %p146 = scmp.eq.s32.totalorder %s18, 1
      %p147 = por %p145, %p146
      %p148 = scmp.ne.s32.totalorder %s140, %s143
      %p149 = scmp.eq.s32.totalorder %s18, 0
      %p150 = por %p148, %p149
      %p151 = scmp.ne.s32.totalorder %s140, %s143
      %p152 = scmp.eq.s32.totalorder %s23, 1
      %p153 = por %p151, %p152
      %p154 = scmp.ne.s32.totalorder %s143, %s144
      %p155 = scmp.eq.s32.totalorder %s23, 0
      %p156 = por %p154, %p155
      %p157 = scmp.ne.s32.totalorder %s143, %s144
      %p158 = scmp.eq.s32.totalorder %s24, 1
      %p159 = por %p157, %p158
      %p161 = scmp.ne.s32.totalorder %s144, %s160
      %p162 = scmp.eq.s32.totalorder %s24, 0
      %p163 = por %p161, %p162
      %s164 = ssub.s32 %s25, %s37
      %s165 = ssub.s32 %s26, %s33
      %s166 = sor.u32 %s164, %s165
      %p167 = scmp.eq.s32.totalorder %s166, 0
      %s169 = sadd.s32 %s168, 1
      %s170 = scalar_select %p167, %s168, %s169
      %p173 = pneg %p167
      %p174 = scmp.eq.s32.totalorder %s18, 1
      %p175 = por %p173, %p174
      %p176 = scmp.ne.s32.totalorder %s168, %s171
      %p177 = scmp.eq.s32.totalorder %s18, 0
      %p178 = por %p176, %p177
      %p179 = scmp.ne.s32.totalorder %s168, %s171
      %p180 = scmp.eq.s32.totalorder %s23, 1
      %p181 = por %p179, %p180
      %p182 = scmp.ne.s32.totalorder %s171, %s172
      %p183 = scmp.eq.s32.totalorder %s23, 0
      %p184 = por %p182, %p183
      %p185 = scmp.ne.s32.totalorder %s171, %s172
      %p186 = scmp.eq.s32.totalorder %s24, 1
      %p187 = por %p185, %p186
      %p189 = scmp.ne.s32.totalorder %s172, %s188
      %p190 = scmp.eq.s32.totalorder %s24, 0
      %p191 = por %p189, %p190
      %p192 = scmp.le.s32.totalorder 1, %s18
      %p193 = scmp.lt.s32.totalorder %s18, 3
      %p194 = pnand %p192, %p193
      %p195 = pneg %p194
      // Predicated region
      $region9: #{tpu_custom_call.1} parent=5 // pred_check
        _
      $region10: #{tpu_custom_call.1} parent=5 // pred_check_branch
        %197 = sbr.rel (%p194) target = $region12
      $region11: #{tpu_custom_call.1} parent=5 // pred_region
        %s198 = ssub.s32 %s18, 1
        // Predicated region
        $region13: #{tpu_custom_call.1} parent=11 // pred_check
          %p199 = pneg %p107
        $region14: #{tpu_custom_call.1} parent=11 // pred_check_branch
          %201 = sbr.rel (%p199) target = $region16
        $region15: #{tpu_custom_call.1} parent=11 // pred_region
          _
        $region16: #{tpu_custom_call.1} parent=11 // pred_fallthru
          _
        // Predicated region
        $region17: #{tpu_custom_call.1} parent=11 // pred_check
          %p202 = pneg %p128
        $region18: #{tpu_custom_call.1} parent=11 // pred_check_branch
          %204 = sbr.rel (%p202) target = $region20
        $region19: #{tpu_custom_call.1} parent=11 // pred_region
          _
        $region20: #{tpu_custom_call.1} parent=11 // pred_fallthru
          _
      $region12: #{tpu_custom_call.1} parent=5 // pred_fallthru
        _
      %p205 = scmp.lt.s32.totalorder %s18, 2
      // Predicated region
      $region21: #{tpu_custom_call.1} parent=5 // pred_check
        %p206 = pneg %p205
      $region22: #{tpu_custom_call.1} parent=5 // pred_check_branch
        %208 = sbr.rel (%p206) target = $region24
      $region23: #{tpu_custom_call.1} parent=5 // pred_region
        // Predicated region
        $region25: #{tpu_custom_call.1} parent=23 // pred_check
          %p209 = pneg %p52
        $region26: #{tpu_custom_call.1} parent=23 // pred_check_branch
          %211 = sbr.rel (%p209) target = $region28
        $region27: #{tpu_custom_call.1} parent=23 // pred_region
          %s212 = smul.u32 2, %s26
          %p213 = scmp.lt.s32.totalorder %s25, 1
          %s214 = scalar_select %p213, %s25, 1
          %p215 = scmp.lt.s32.totalorder %s212, 1
          %s216 = scalar_select %p215, %s212, 1
          %s217 = smul.addr %s214, 28
          %s218 = sadd.s32 %s216, %s217
          %s219 = smul.addr %s218, 4
          %s220 = scalar_lea.vmem %s0, %s219
          %s221 = smul.u32 2, %s26
        $region28: #{tpu_custom_call.1} parent=23 // pred_fallthru
          _
        // Predicated region
        $region29: #{tpu_custom_call.1} parent=23 // pred_check
          %p222 = pneg %p80
        $region30: #{tpu_custom_call.1} parent=23 // pred_check_branch
          %224 = sbr.rel (%p222) target = $region32
        $region31: #{tpu_custom_call.1} parent=23 // pred_region
          %s225 = smul.u32 2, %s26
          %p226 = scmp.lt.s32.totalorder %s25, 1
          %s227 = scalar_select %p226, %s25, 1
          %p228 = scmp.lt.s32.totalorder %s225, 1
          %s229 = scalar_select %p228, %s225, 1
          %s230 = smul.addr %s227, 2
          %s231 = sadd.s32 %s229, %s230
          %s232 = smul.addr %s231, 8
          %s233 = scalar_lea.vmem %s1, %s232
          %s234 = smul.u32 2, %s26
        $region32: #{tpu_custom_call.1} parent=23 // pred_fallthru
          _
      $region24: #{tpu_custom_call.1} parent=5 // pred_fallthru
        _
      %p235 = scmp.le.s32.totalorder 1, %s18
      %p236 = scmp.lt.s32.totalorder %s18, 3
      %p237 = pnand %p235, %p236
      %p238 = pneg %p237
      // Predicated region
      $region33: #{tpu_custom_call.1} parent=5 // pred_check
        _
      $region34: #{tpu_custom_call.1} parent=5 // pred_check_branch
        %240 = sbr.rel (%p237) target = $region36
      $region35: #{tpu_custom_call.1} parent=5 // pred_region
        %s241 = ssub.s32 %s18, 1
        %s242 = smul.u32 2, %s28
        %p243 = scmp.lt.s32.totalorder %s27, 1
        %s244 = scalar_select %p243, %s27, 1
        %p245 = scmp.lt.s32.totalorder %s242, 1
        %s246 = scalar_select %p245, %s242, 1
        %s247 = smul.addr %s244, 28
        %s248 = sadd.s32 %s246, %s247
        %s249 = smul.addr %s248, 4
        %s250 = scalar_lea.vmem %s0, %s249
        %p251 = pneg %p58
        %p252 = pneg %p55
        %s253 = smul.u32 2, %s28
        %p254 = scmp.lt.s32.totalorder %s27, 1
        %s255 = scalar_select %p254, %s27, 1
        %p256 = scmp.lt.s32.totalorder %s253, 1
        %s257 = scalar_select %p256, %s253, 1
        %s258 = smul.addr %s255, 2
        %s259 = sadd.s32 %s257, %s258
        %s260 = smul.addr %s259, 8
        %s261 = scalar_lea.vmem %s1, %s260
        %p262 = pneg %p86
        %p263 = pneg %p83
        %p264 = pneg %p107
        %p265 = pneg %p104
        %p266 = pneg %p128
        %p267 = pneg %p125
        %p268 = pneg %p156
        %p269 = pneg %p153
        %s270 = sand.u32 %s143, 1
        %s271 = scalar_lea.sflag [#allocation3], %s270
        %s272 = sand.u32 %s143, 1
        %s273 = smul.addr %s272, 16
        %s274 = scalar_lea.vmem [#allocation2], %s273
        %p275 = pneg %p184
        %p276 = pneg %p181
        %s277 = sand.u32 %s171, 1
        %s278 = scalar_lea.sflag [#allocation5], %s277
        %s279 = sand.u32 %s171, 1
        %s280 = smul.addr %s279, 16
        %s281 = scalar_lea.vmem [#allocation4], %s280
        %s282 = smul.u32 2, %s28
        %p283 = scmp.lt.s32.totalorder %s27, 1
        %s284 = scalar_select %p283, %s27, 1
        %p285 = scmp.lt.s32.totalorder %s282, 1
        %s286 = scalar_select %p285, %s282, 1
        %s287 = smul.addr %s284, 28
        %s288 = sadd.s32 %s286, %s287
        %s289 = smul.addr %s288, 4
        %s290 = scalar_lea.vmem %s0, %s289
        %s291 = smul.u32 2, %s28
        %s292 = smul.u32 2, %s28
        %p293 = scmp.lt.s32.totalorder %s27, 1
        %s294 = scalar_select %p293, %s27, 1
        %p295 = scmp.lt.s32.totalorder %s292, 1
        %s296 = scalar_select %p295, %s292, 1
        %s297 = smul.addr %s294, 2
        %s298 = sadd.s32 %s296, %s297
        %s299 = smul.addr %s298, 8
        %s300 = scalar_lea.vmem %s1, %s299
        %s301 = smul.u32 2, %s28
        %s302 = smul.u32 2, %s28
        %s303 = smul.u32 2, %s28
        %v305 = vld [vmem:[%s2] sm:$0xf]
        %v306 = vld [vmem:[%s2 + $0x4] sm:$0xf]
        %v307 = vld [vmem:[%s2 + $0x8] sm:$0xf]
        %v308 = vld [vmem:[%s2 + $0xc] sm:$0xf]
        %v309 = vld [vmem:[%s290] sm:$0xff]
        %v310 = vld [vmem:[%s290 + $0x8] sm:$0xff]
        %v311 = vld [vmem:[%s290 + $0x10] sm:$0xff]
        %v312 = vld [vmem:[%s290 + $0x18] sm:$0xff]
        %v313 = vld [vmem:[%s290 + $0x20] sm:$0xff]
        %v314 = vld [vmem:[%s290 + $0x28] sm:$0xff]
        %v315 = vld [vmem:[%s290 + $0x30] sm:$0xff]
        %v316 = vld [vmem:[%s290 + $0x38] sm:$0xff]
        %v317 = vld [vmem:[%s290 + $0x40] sm:$0xff]
        %v318 = vld [vmem:[%s290 + $0x48] sm:$0xff]
        %v319 = vld [vmem:[%s290 + $0x50] sm:$0xff]
        %v320 = vld [vmem:[%s290 + $0x58] sm:$0xff]
        %v321 = vld [vmem:[%s290 + $0x60] sm:$0xff]
        %v322 = vld [vmem:[%s290 + $0x68] sm:$0x33]
        %v323 = vld [vmem:[%s3] sm:$0xff]
        %v324 = vld [vmem:[%s3 + $0x8] sm:$0xff]
        %v325 = vld [vmem:[%s3 + $0x10] sm:$0xff]
        %v326 = vld [vmem:[%s3 + $0x18] sm:$0xff]
        %328 = vset.pattern.permute.xlu0 0
        %329 = vperm.xlu0 %328, %v323
        %v330 = vpop.permute.xlu0 %329
        %333 = vset.pattern.permute.xlu0 0
        %334 = vperm.xlu0 %333, %v324
        %v335 = vpop.permute.xlu0 %334
        %338 = vset.pattern.permute.xlu0 0
        %339 = vperm.xlu0 %338, %v325
        %v340 = vpop.permute.xlu0 %339
        %343 = vset.pattern.permute.xlu0 0
        %344 = vperm.xlu0 %343, %v326
        %v345 = vpop.permute.xlu0 %344
        %v351 = vunpack.c.l.b16 %v305
        %v352 = vunpack.c.l.b16 %v306
        %v353 = vunpack.c.l.b16 %v307
        %v354 = vunpack.c.l.b16 %v308
        %v355 = vpack.c.b16 %v352, %v351
        %v356 = vpack.c.b16 %v354, %v353
        %v371 = vunpack.c.l.b16 %v309
        %v372 = vunpack.c.h.b16 %v309
        %v373 = vunpack.c.l.b16 %v310
        %v374 = vunpack.c.h.b16 %v310
        %v375 = vunpack.c.l.b16 %v311
        %v376 = vunpack.c.h.b16 %v311
        %v377 = vunpack.c.l.b16 %v312
        %v378 = vunpack.c.h.b16 %v312
        %v379 = vunpack.c.l.b16 %v313
        %v380 = vunpack.c.h.b16 %v313
        %v381 = vunpack.c.l.b16 %v314
        %v382 = vunpack.c.h.b16 %v314
        %v383 = vunpack.c.l.b16 %v315
        %v384 = vunpack.c.h.b16 %v315
        %v385 = vunpack.c.l.b16 %v316
        %v386 = vunpack.c.h.b16 %v316
        %v387 = vunpack.c.l.b16 %v317
        %v388 = vunpack.c.h.b16 %v317
        %v389 = vunpack.c.l.b16 %v318
        %v390 = vunpack.c.h.b16 %v318
        %v391 = vunpack.c.l.b16 %v319
        %v392 = vunpack.c.h.b16 %v319
        %v393 = vunpack.c.l.b16 %v320
        %v394 = vunpack.c.h.b16 %v320
        %v395 = vunpack.c.l.b16 %v321
        %v396 = vunpack.c.h.b16 %v321
        %v397 = vunpack.c.l.b16 %v322
        %v398 = vunpack.c.h.b16 %v322
        %v399 = vpack.c.b16 %v373, %v371
        %v400 = vpack.c.b16 %v374, %v372
        %v401 = vpack.c.b16 %v377, %v375
        %v402 = vpack.c.b16 %v378, %v376
        %v403 = vpack.c.b16 %v381, %v379
        %v404 = vpack.c.b16 %v382, %v380
        %v405 = vpack.c.b16 %v385, %v383
        %v406 = vpack.c.b16 %v386, %v384
        %v407 = vpack.c.b16 %v389, %v387
        %v408 = vpack.c.b16 %v390, %v388
        %v409 = vpack.c.b16 %v393, %v391
        %v410 = vpack.c.b16 %v394, %v392
        %v411 = vpack.c.b16 %v397, %v395
        %v412 = vpack.c.b16 %v398, %v396
        %vm425 = vcmask 883712
        %v427 = vsel %vm425, %v355, 0
        %v430 = vsel %vm425, %v356, 0
        %vm432 = vcmask 1045504
        %v434 = vsel %vm432, %v411, 0
        %v437 = vsel %vm432, %v412, 0
        %439 = vmatprep.subr.bf16.mxu0 %v400
        %440 = vmatpush1.bf16.msra.mxu0 %v399
        %441 = vmatprep.subr.bf16.mxu0 %v402
        %442 = vmatpush1.bf16.msra.mxu0 %v401
        %443 = vmatprep.subr.bf16.mxu0 %v404
        %444 = vmatpush1.bf16.msra.mxu0 %v403
        %445 = vmatprep.subr.bf16.mxu0 %v406
        %446 = vmatpush1.bf16.msra.mxu0 %v405
        %447 = vmatprep.subr.bf16.mxu0 %v408
        %448 = vmatpush1.bf16.msra.mxu0 %v407
        %449 = vmatprep.subr.bf16.mxu0 %v410
        %450 = vmatpush1.bf16.msra.mxu0 %v409
        %451 = vmatprep.subr.bf16.mxu0 %v437
        %452 = vmatpush1.bf16.msra.mxu0 %v434
        %453 = vmatprep.subr.bf16.mxu0 0
        %454 = vmatpush1.bf16.msra.mxu0 0
        %455 = vmatprep.subr.bf16.mxu0 0
        %456 = vmatpush1.bf16.msra.mxu0 0
        %457 = vmatprep.subr.bf16.mxu0 0
        %458 = vmatpush1.bf16.msra.mxu0 0
        %459 = vmatprep.subr.bf16.mxu0 0
        %460 = vmatpush1.bf16.msra.mxu0 0
        %461 = vmatprep.subr.bf16.mxu0 0
        %462 = vmatpush1.bf16.msra.mxu0 0
        %463 = vmatprep.subr.bf16.mxu0 0
        %464 = vmatpush1.bf16.msra.mxu0 0
        %465 = vmatprep.subr.bf16.mxu0 0
        %466 = vmatpush1.bf16.msra.mxu0 0
        %467 = vmatprep.subr.bf16.mxu0 0
        %468 = vmatpush1.bf16.msra.mxu0 0
        %469 = vmatprep.subr.bf16.mxu0 0
        %470 = vmatpush1.bf16.msra.mxu0 0
        %471 = vmatprep.mubr.bf16.mxu0 0
        %472 = vmatmul.mubr.bf16.gmra.mrb[0].mxu0 %v427
        %v473 = vpop.f32.mrb[0].mxu0
        %v474 = vadd.f32 %v330, %v473
        %v475 = vpop.f32.mrb[0].mxu0
        %v476 = vadd.f32 %v330, %v475
        %v477 = vpop.f32.mrb[0].mxu0
        %v478 = vadd.f32 %v335, %v477
        %v479 = vpop.f32.mrb[0].mxu0
        %v480 = vadd.f32 %v335, %v479
        %481 = vmatprep.mubr.bf16.mxu0 0
        %482 = vmatmul.mubr.bf16.gmra.mrb[0].mxu0 %v430
        %v483 = vpop.f32.mrb[0].mxu0
        %v484 = vadd.f32 %v340, %v483
        %v485 = vpop.f32.mrb[0].mxu0
        %v486 = vadd.f32 %v340, %v485
        %v487 = vpop.f32.mrb[0].mxu0
        %v488 = vadd.f32 %v345, %v487
        %v489 = vpop.f32.mrb[0].mxu0
        %v490 = vadd.f32 %v345, %v489
        %491 = vdwg.mxu0
        %v492 = vxor.u32 %v474, 2147483648
        %v493 = vxor.u32 %v476, 2147483648
        %v494 = vmul.f32 %v492, 1.442695
        %v495 = vpow.pop %v494
        %v496 = vmul.f32 %v493, 1.442695
        %v497 = vpow.pop %v496
        %v498 = vadd.f32 %v495, 1.0
        %v499 = vadd.f32 %v497, 1.0
        %v500 = vrcp.pop %v498
        %v501 = vmul.f32 1.0, %v500
        %v502 = vrcp.pop %v499
        %v503 = vmul.f32 1.0, %v502
        %v504 = vxor.u32 %v478, 2147483648
        %v505 = vxor.u32 %v480, 2147483648
        %v506 = vmul.f32 %v504, 1.442695
        %v507 = vpow.pop %v506
        %v508 = vmul.f32 %v505, 1.442695
        %v509 = vpow.pop %v508
        %v510 = vadd.f32 %v507, 1.0
        %v511 = vadd.f32 %v509, 1.0
        %v512 = vrcp.pop %v510
        %v513 = vmul.f32 1.0, %v512
        %v514 = vrcp.pop %v511
        %v515 = vmul.f32 1.0, %v514
        %v516 = vtanh.pop %v484
        %v517 = vtanh.pop %v486
        %v518 = vxor.u32 %v488, 2147483648
        %v519 = vxor.u32 %v490, 2147483648
        %v520 = vmul.f32 %v518, 1.442695
        %v521 = vpow.pop %v520
        %v522 = vmul.f32 %v519, 1.442695
        %v523 = vpow.pop %v522
        %v524 = vadd.f32 %v521, 1.0
        %v525 = vadd.f32 %v523, 1.0
        %v526 = vrcp.pop %v524
        %v527 = vmul.f32 1.0, %v526
        %v528 = vrcp.pop %v525
        %v529 = vmul.f32 1.0, %v528
        %v530 = vld [vmem:[%s300] sm:$0xff]
        %v531 = vld [vmem:[%s300 + $0x8] sm:$0xff]
        %v532 = vmul.f32 %v513, %v530
        %v533 = vmul.f32 %v515, %v531
        %v534 = vmul.f32 %v501, %v516
        %v535 = vmul.f32 %v503, %v517
        %v536 = vadd.f32 %v532, %v534
        %v537 = vadd.f32 %v533, %v535
        %v538 = vtanh.pop %v536
        %v539 = vtanh.pop %v537
        %v540 = vmul.f32 %v527, %v538
        %v541 = vmul.f32 %v529, %v539
        %542 = vst [vmem:[%s281] sm:$0xff] %v536
        %543 = vst [vmem:[%s281 + $0x8] sm:$0xff] %v537
        %544 = vst [vmem:[%s274] sm:$0xff] %v540
        %545 = vst [vmem:[%s274 + $0x8] sm:$0xff] %v541
        %s546 = sand.u32 %s143, 1
        %s547 = scalar_lea.sflag [#allocation3], %s546
        %s548 = sand.u32 %s143, 1
        %s549 = smul.addr %s548, 16
        %s550 = scalar_lea.vmem [#allocation2], %s549
        %s551 = sand.u32 %s171, 1
        %s552 = scalar_lea.sflag [#allocation5], %s551
        %s553 = sand.u32 %s171, 1
        %s554 = smul.addr %s553, 16
        %s555 = scalar_lea.vmem [#allocation4], %s554
        // Predicated region
        $region37: #{tpu_custom_call.1} parent=35 // pred_check
          %p556 = pneg %p153
        $region38: #{tpu_custom_call.1} parent=35 // pred_check_branch
          %558 = sbr.rel (%p556) target = $region40
        $region39: #{tpu_custom_call.1} parent=35 // pred_region
          %s559 = smul.u32 2, %s28
          %s561 = ssub.s32 256, 256
          %562 = vsyncadd %s547, %s561
          %s563 = smul.addr %s27, 2
          %s564 = sadd.s32 %s559, %s563
          %s565 = smul.addr %s564, 128
          %s566 = scalar_lea.hbm %s4, %s565
          %s568 = sshll.u32 %s550, 4
          %s569 = int_to_ptr.vmem [resolvable:$true] %s568
          %571 = dma.vmem_to_hbm [thread:$0]  %s569, 256, %s566, %s547
        $region40: #{tpu_custom_call.1} parent=35 // pred_fallthru
          _
        // Predicated region
        $region41: #{tpu_custom_call.1} parent=35 // pred_check
          %p572 = pneg %p181
        $region42: #{tpu_custom_call.1} parent=35 // pred_check_branch
          %574 = sbr.rel (%p572) target = $region44
        $region43: #{tpu_custom_call.1} parent=35 // pred_region
          %s575 = smul.u32 2, %s28
          %s577 = ssub.s32 256, 256
          %578 = vsyncadd %s552, %s577
          %s579 = smul.addr %s27, 2
          %s580 = sadd.s32 %s575, %s579
          %s581 = smul.addr %s580, 128
          %s582 = scalar_lea.hbm %s5, %s581
          %s584 = sshll.u32 %s555, 4
          %s585 = int_to_ptr.vmem [resolvable:$true] %s584
          %587 = dma.vmem_to_hbm [thread:$0]  %s585, 256, %s582, %s552
        $region44: #{tpu_custom_call.1} parent=35 // pred_fallthru
          _
      $region36: #{tpu_custom_call.1} parent=5 // pred_fallthru
        _
      %p588 = scmp.le.s32.totalorder 2, %s18
      // Predicated region
      $region45: #{tpu_custom_call.1} parent=5 // pred_check
        %p589 = pneg %p588
      $region46: #{tpu_custom_call.1} parent=5 // pred_check_branch
        %591 = sbr.rel (%p589) target = $region48
      $region47: #{tpu_custom_call.1} parent=5 // pred_region
        %s592 = ssub.s32 %s18, 2
        // Predicated region
        $region49: #{tpu_custom_call.1} parent=47 // pred_check
          %p593 = pneg %p159
        $region50: #{tpu_custom_call.1} parent=47 // pred_check_branch
          %595 = sbr.rel (%p593) target = $region52
        $region51: #{tpu_custom_call.1} parent=47 // pred_region
          %s596 = sand.u32 %s144, 1
          %s597 = scalar_lea.sflag [#allocation3], %s596
          %s598 = sand.u32 %s144, 1
          %s599 = smul.addr %s598, 16
          %s600 = scalar_lea.vmem [#allocation2], %s599
          %601 = dma.done %s597, 256
        $region52: #{tpu_custom_call.1} parent=47 // pred_fallthru
          _
        // Predicated region
        $region53: #{tpu_custom_call.1} parent=47 // pred_check
          %p602 = pneg %p187
        $region54: #{tpu_custom_call.1} parent=47 // pred_check_branch
          %604 = sbr.rel (%p602) target = $region56
        $region55: #{tpu_custom_call.1} parent=47 // pred_region
          %s605 = sand.u32 %s172, 1
          %s606 = scalar_lea.sflag [#allocation5], %s605
          %s607 = sand.u32 %s172, 1
          %s608 = smul.addr %s607, 16
          %s609 = scalar_lea.vmem [#allocation4], %s608
          %610 = dma.done %s606, 256
        $region56: #{tpu_custom_call.1} parent=47 // pred_fallthru
          _
      $region48: #{tpu_custom_call.1} parent=5 // pred_fallthru
        _
    $region6: #{tpu_custom_call.1} parent=1 // loop_footer
      %s22 = sadd.s32 1, %s18
    $region7: #{tpu_custom_call.1} parent=1 // loop_footer_branch
      %17 = sbr.rel target = $region3
    $region8: #{tpu_custom_call.1} parent=1 // loop_exit
      _
    %611 = vsyncpa [#allocation3], 1
    %s612 = scalar_lea.sflag [#allocation3], 1
    %613 = vsyncpa %s612, 1
    %614 = vsyncpa [#allocation5], 1
    %s615 = scalar_lea.sflag [#allocation5], 1
    %616 = vsyncpa %s615, 1

</llo_original>
